<compile_context>
chip_gen: v7x
topology: tpu7x:2x2x1
jax: 0.10.0
libtpu: 0.0.40
codegen_flags: <defaults>
</compile_context>

<pallas_src>
import math

import jax
import jax.numpy as jnp
from jax.experimental import pallas as pl
from jax.experimental.pallas import tpu as pltpu

LANE = 128  # TPU vreg lane width


def _round_up(n, m):
    return ((n + m - 1) // m) * m


def _cdiv(a, b):
    return -(-a // b)


def dqn_mlp_kernel(x_ref, w1_ref, b1_ref, w2_ref, b2_ref, w3_ref, b3_ref, o_ref):
    # One batch tile per grid step; weights/biases are resident in VMEM.
    # bf16 MXU inputs, f32 accumulation, f32 VPU math for bias + ReLU.
    x = x_ref[...]  # already bf16 (cast once in the wrapper)
    h1 = jnp.dot(x, w1_ref[...], preferred_element_type=jnp.float32) + b1_ref[...]
    h1 = jnp.maximum(h1, 0.0).astype(jnp.bfloat16)
    h2 = jnp.dot(h1, w2_ref[...], preferred_element_type=jnp.float32) + b2_ref[...]
    h2 = jnp.maximum(h2, 0.0).astype(jnp.bfloat16)
    out = jnp.dot(h2, w3_ref[...], preferred_element_type=jnp.float32) + b3_ref[...]
    # w3/b3 are zero-padded to 128 lanes for the MXU; store only the real action
    # columns (narrow masked store -> ~32x less HBM writeback, no wrapper slice pass).
    o_ref[...] = out[:, : o_ref.shape[-1]].astype(o_ref.dtype)


def init_params(key, state_dim, action_dim, hidden=256):
    """Deterministic init matching PyTorch nn.Linear default:
    U(-1/sqrt(fan_in), 1/sqrt(fan_in)) for both weights and biases. f32 master."""
    keys = jax.random.split(key, 6)

    def lin(kw, kb, fan_in, fan_out):
        bound = 1.0 / math.sqrt(fan_in)
        w = jax.random.uniform(kw, (fan_in, fan_out), jnp.float32, -bound, bound)
        b = jax.random.uniform(kb, (1, fan_out), jnp.float32, -bound, bound)
        return w, b

    w1, b1 = lin(keys[0], keys[1], state_dim, hidden)
    w2, b2 = lin(keys[2], keys[3], hidden, hidden)
    w3, b3 = lin(keys[4], keys[5], hidden, action_dim)
    return {"w1": w1, "b1": b1, "w2": w2, "b2": b2, "w3": w3, "b3": b3}


def prepare_params(params, weight_dtype=jnp.bfloat16):
    """One-time prep: cast weights to bf16 for the MXU and zero-pad the last
    layer's output features up to a multiple of 128 lanes (stays at 128 for
    action_dim=4 -- do NOT pad further; the kernel is memory/overhead bound)."""
    action_dim = params["w3"].shape[1]
    out_pad = _round_up(action_dim, LANE)
    w3 = jnp.pad(params["w3"], ((0, 0), (0, out_pad - action_dim)))
    b3 = jnp.pad(params["b3"], ((0, 0), (0, out_pad - action_dim)))
    return {
        "w1": params["w1"].astype(weight_dtype),
        "b1": params["b1"].astype(jnp.float32),
        "w2": params["w2"].astype(weight_dtype),
        "b2": params["b2"].astype(jnp.float32),
        "w3": w3.astype(weight_dtype),
        "b3": b3.astype(jnp.float32),
    }


def _choose_tiling(B, block_b, min_split_rows=256):
    """Pick (tm, Bp, ntiles) so padding is at most a few sublanes per tile and,
    for large B, the grid has >=2 steps so v7x's two TensorCores both get work."""
    ntiles = _cdiv(B, block_b)
    if ntiles == 1 and B >= 2 * min_split_rows:
        ntiles = 2
    tm = _round_up(_cdiv(B, ntiles), 8)
    Bp = ntiles * tm
    return tm, Bp, ntiles


def dqn_forward(x, prepared, action_dim, *, block_b=2048):
    """x: [B, state_dim] float32 (or bf16). prepared: output of prepare_params."""
    B, state_dim = x.shape
    hidden1 = prepared["w1"].shape[1]
    hidden2 = prepared["w2"].shape[1]
    out_pad = prepared["w3"].shape[1]

    tm, Bp, ntiles = _choose_tiling(B, block_b)

    # Cast x to bf16 once here (halves the already-narrow x DMA; kernel uses bf16 MXU).
    xb = x.astype(jnp.bfloat16)
    if Bp != B:
        xb = jnp.pad(xb, ((0, Bp - B), (0, 0)))

    w1, b1, w2, b2, w3, b3 = (prepared[k] for k in ("w1", "b1", "w2", "b2", "w3", "b3"))

    def resident(i):  # block index never changes -> weights stay VMEM-resident
        return (0, 0)

    flops = 2 * Bp * (state_dim * hidden1 + hidden1 * hidden2 + hidden2 * out_pad)
    bytes_accessed = (
        int(xb.size) * xb.dtype.itemsize
        + sum(int(a.size) * a.dtype.itemsize for a in (w1, b1, w2, b2, w3, b3))
        + Bp * action_dim * 4
    )

    out = pl.pallas_call(
        dqn_mlp_kernel,
        out_shape=jax.ShapeDtypeStruct((Bp, action_dim), jnp.float32),
        grid=(ntiles,),
        in_specs=[
            pl.BlockSpec((tm, state_dim), lambda i: (i, 0)),  # batch-tiled x (bf16)
            pl.BlockSpec(w1.shape, resident),
            pl.BlockSpec(b1.shape, resident),
            pl.BlockSpec(w2.shape, resident),
            pl.BlockSpec(b2.shape, resident),
            pl.BlockSpec(w3.shape, resident),
            pl.BlockSpec(b3.shape, resident),
        ],
        out_specs=pl.BlockSpec((tm, action_dim), lambda i: (i, 0)),  # narrow store
        compiler_params=pltpu.CompilerParams(
            dimension_semantics=("parallel",),      # megacore-shard the batch axis
            vmem_limit_bytes=32 * 1024 * 1024,      # raise v5e's 16 MiB scoped default
        ),
        cost_estimate=pl.CostEstimate(
            flops=flops, transcendentals=0, bytes_accessed=bytes_accessed
        ),
    )(xb, w1, b1, w2, b2, w3, b3)

    # Only padded rows (at most a few sublanes) need dropping; columns are already exact.
    return out if Bp == B else out[:B]
    # TODO(synk): for the per-step acting path (B~1-32) the call is dominated by the
    # ~140 KB bf16 weight DMA + launch overhead; a cross-pallas_call weight-prefetch
    # (start DMA earlier, return (sem, VMEM ref), consume here) is the remaining lever.


def dqn_reference(x, params):
    """Full-f32 reference matching the PyTorch forward exactly."""
    h1 = jnp.maximum(x @ params["w1"] + params["b1"], 0.0)
    h2 = jnp.maximum(h1 @ params["w2"] + params["b2"], 0.0)
    return h2 @ params["w3"] + params["b3"]


def dqn_reference_bf16(x, prepared, action_dim):
    """Reference using the same bf16 weights / f32 accumulation as the kernel."""
    h1 = jnp.maximum(
        jnp.dot(x.astype(jnp.bfloat16), prepared["w1"],
                preferred_element_type=jnp.float32) + prepared["b1"], 0.0)
    h2 = jnp.maximum(
        jnp.dot(h1.astype(jnp.bfloat16), prepared["w2"],
                preferred_element_type=jnp.float32) + prepared["b2"], 0.0)
    out = jnp.dot(h2.astype(jnp.bfloat16), prepared["w3"],
                  preferred_element_type=jnp.float32) + prepared["b3"]
    return out[:, :action_dim]


if __name__ == "__main__":
    # LunarLander-v2: state_dim=8, action_dim=4.
    B, STATE_DIM, ACTION_DIM, HIDDEN = 2, 8, 4, 256

    key = jax.random.PRNGKey(0)
    k_params, k_x, k_x2, k_x3 = jax.random.split(key, 4)
    params = init_params(k_params, STATE_DIM, ACTION_DIM, HIDDEN)
    prepared = prepare_params(params)

    # Small-batch acting path (single partial tile).
    x = jax.random.normal(k_x, (B, STATE_DIM), dtype=jnp.float32)
    out = jax.block_until_ready(dqn_forward(x, prepared, ACTION_DIM))
    assert out.shape == (B, ACTION_DIM)
    ref_bf16 = dqn_reference_bf16(x, prepared, ACTION_DIM)
    assert jnp.allclose(out, ref_bf16, atol=1e-3, rtol=1e-3), "bf16-matched ref mismatch"
    ref_f32 = dqn_reference(x, params)
    assert jnp.allclose(out, ref_f32, atol=3e-2, rtol=3e-2), "f32 semantics drifted"

    # Medium batch: single tile, a few padded sublane rows.
    B2 = 260
    x2 = jax.random.normal(k_x2, (B2, STATE_DIM), dtype=jnp.float32)
    out2 = jax.block_until_ready(dqn_forward(x2, prepared, ACTION_DIM))
    assert out2.shape == (B2, ACTION_DIM)
    ref2 = dqn_reference_bf16(x2, prepared, ACTION_DIM)
    assert jnp.allclose(out2, ref2, atol=1e-3, rtol=1e-3), "medium-batch mismatch"

    # Larger batch: exercises the >=2-step parallel grid (v7x megacore path) + padding.
    B3 = 600
    x3 = jax.random.normal(k_x3, (B3, STATE_DIM), dtype=jnp.float32)
    out3 = jax.block_until_ready(dqn_forward(x3, prepared, ACTION_DIM))
    assert out3.shape == (B3, ACTION_DIM)
    ref3 = dqn_reference_bf16(x3, prepared, ACTION_DIM)
    assert jnp.allclose(out3, ref3, atol=1e-3, rtol=1e-3), "multi-tile mismatch"

    print("KERNEL_OK")
</pallas_src>

<mosaic_0001>
module attributes {stable_mosaic.version = 11 : i64} {
  func.func @dqn_mlp_kernel(%arg0: i32, %arg1: memref<8x8xbf16, #tpu.memory_space<vmem>>, %arg2: memref<8x256xbf16, #tpu.memory_space<vmem>>, %arg3: memref<1x256xf32, #tpu.memory_space<vmem>>, %arg4: memref<256x256xbf16, #tpu.memory_space<vmem>>, %arg5: memref<1x256xf32, #tpu.memory_space<vmem>>, %arg6: memref<256x128xbf16, #tpu.memory_space<vmem>>, %arg7: memref<1x128xf32, #tpu.memory_space<vmem>>, %arg8: memref<8x4xf32, #tpu.memory_space<vmem>>) attributes {dimension_semantics = [#tpu.dimension_semantics<parallel>], iteration_bounds = array<i64: 1>, scalar_prefetch = 0 : i64, scratch_operands = 0 : i64, tpu.core_type = #tpu.core_type<tc>, window_params = [{transform_indices = @transform_0, window_bounds = array<i64: 8, 8>}, {pipeline_mode = #tpu.pipeline_mode<synchronous>, transform_indices = @transform_1, window_bounds = array<i64: 8, 256>}, {pipeline_mode = #tpu.pipeline_mode<synchronous>, transform_indices = @transform_2, window_bounds = array<i64: 1, 256>}, {pipeline_mode = #tpu.pipeline_mode<synchronous>, transform_indices = @transform_3, window_bounds = array<i64: 256, 256>}, {pipeline_mode = #tpu.pipeline_mode<synchronous>, transform_indices = @transform_4, window_bounds = array<i64: 1, 256>}, {pipeline_mode = #tpu.pipeline_mode<synchronous>, transform_indices = @transform_5, window_bounds = array<i64: 256, 128>}, {pipeline_mode = #tpu.pipeline_mode<synchronous>, transform_indices = @transform_6, window_bounds = array<i64: 1, 128>}, {transform_indices = @transform_7, window_bounds = array<i64: 8, 4>}]} {
    %c0 = arith.constant 0 : index
    %c0_0 = arith.constant 0 : index
    %0 = vector.load %arg1[%c0, %c0_0] : memref<8x8xbf16, #tpu.memory_space<vmem>>, vector<8x8xbf16>
    %c0_1 = arith.constant 0 : index
    %c0_2 = arith.constant 0 : index
    %1 = vector.load %arg2[%c0_1, %c0_2] : memref<8x256xbf16, #tpu.memory_space<vmem>>, vector<8x256xbf16>
    %cst = arith.constant dense<0.000000e+00> : vector<8x256xf32>
    %2 = tpu.matmul %0, %1, %cst {dimension_numbers = #tpu.dot_dimension_numbers<[1], [0], [0], [1], [0, 0, 1, 1], [], []>} : vector<8x8xbf16>, vector<8x256xbf16>, vector<8x256xf32> -> vector<8x256xf32>
    %c0_3 = arith.constant 0 : index
    %c0_4 = arith.constant 0 : index
    %3 = vector.load %arg3[%c0_3, %c0_4] : memref<1x256xf32, #tpu.memory_space<vmem>>, vector<1x256xf32>
    %4 = vector.broadcast %3 : vector<1x256xf32> to vector<8x256xf32>
    %5 = arith.addf %2, %4 : vector<8x256xf32>
    %cst_5 = arith.constant 0.000000e+00 : f32
    %6 = vector.broadcast %cst_5 : f32 to vector<8x256xf32>
    %7 = arith.maximumf %5, %6 : vector<8x256xf32>
    %8 = arith.truncf %7 : vector<8x256xf32> to vector<8x256xbf16>
    %c0_6 = arith.constant 0 : index
    %c0_7 = arith.constant 0 : index
    %9 = vector.load %arg4[%c0_6, %c0_7] : memref<256x256xbf16, #tpu.memory_space<vmem>>, vector<256x256xbf16>
    %cst_8 = arith.constant dense<0.000000e+00> : vector<8x256xf32>
    %10 = tpu.matmul %8, %9, %cst_8 {dimension_numbers = #tpu.dot_dimension_numbers<[1], [0], [0], [1], [0, 0, 1, 1], [], []>} : vector<8x256xbf16>, vector<256x256xbf16>, vector<8x256xf32> -> vector<8x256xf32>
    %c0_9 = arith.constant 0 : index
    %c0_10 = arith.constant 0 : index
    %11 = vector.load %arg5[%c0_9, %c0_10] : memref<1x256xf32, #tpu.memory_space<vmem>>, vector<1x256xf32>
    %12 = vector.broadcast %11 : vector<1x256xf32> to vector<8x256xf32>
    %13 = arith.addf %10, %12 : vector<8x256xf32>
    %cst_11 = arith.constant 0.000000e+00 : f32
    %14 = vector.broadcast %cst_11 : f32 to vector<8x256xf32>
    %15 = arith.maximumf %13, %14 : vector<8x256xf32>
    %16 = arith.truncf %15 : vector<8x256xf32> to vector<8x256xbf16>
    %c0_12 = arith.constant 0 : index
    %c0_13 = arith.constant 0 : index
    %17 = vector.load %arg6[%c0_12, %c0_13] : memref<256x128xbf16, #tpu.memory_space<vmem>>, vector<256x128xbf16>
    %cst_14 = arith.constant dense<0.000000e+00> : vector<8x128xf32>
    %18 = tpu.matmul %16, %17, %cst_14 {dimension_numbers = #tpu.dot_dimension_numbers<[1], [0], [0], [1], [0, 0, 1, 1], [], []>} : vector<8x256xbf16>, vector<256x128xbf16>, vector<8x128xf32> -> vector<8x128xf32>
    %c0_15 = arith.constant 0 : index
    %c0_16 = arith.constant 0 : index
    %19 = vector.load %arg7[%c0_15, %c0_16] : memref<1x128xf32, #tpu.memory_space<vmem>>, vector<1x128xf32>
    %20 = vector.broadcast %19 : vector<1x128xf32> to vector<8x128xf32>
    %21 = arith.addf %18, %20 : vector<8x128xf32>
    %22 = vector.extract_strided_slice %21 {offsets = [0, 0], sizes = [8, 4], strides = [1, 1]} : vector<8x128xf32> to vector<8x4xf32>
    %c0_17 = arith.constant 0 : index
    %c0_18 = arith.constant 0 : index
    %23 = vector.load %arg8[%c0_17, %c0_18] : memref<8x4xf32, #tpu.memory_space<vmem>>, vector<8x4xf32>
    tpu.vector_store %arg8[%c0_17, %c0_18], %22 {strides = array<i32>} : memref<8x4xf32, #tpu.memory_space<vmem>>, vector<8x4xf32>,
    return
  }
  func.func @transform_0(%arg0: i32) -> (i32, i32) {
    %c0_i32 = arith.constant 0 : i32
    %c0_i32_0 = arith.constant 0 : i32
    return %arg0, %c0_i32 : i32, i32
  }
  func.func @transform_1(%arg0: i32) -> (i32, i32) {
    %c0_i32 = arith.constant 0 : i32
    %c0_i32_0 = arith.constant 0 : i32
    %c0_i32_1 = arith.constant 0 : i32
    return %c0_i32, %c0_i32_0 : i32, i32
  }
  func.func @transform_2(%arg0: i32) -> (i32, i32) {
    %c0_i32 = arith.constant 0 : i32
    %c0_i32_0 = arith.constant 0 : i32
    %c0_i32_1 = arith.constant 0 : i32
    return %c0_i32, %c0_i32_0 : i32, i32
  }
  func.func @transform_3(%arg0: i32) -> (i32, i32) {
    %c0_i32 = arith.constant 0 : i32
    %c0_i32_0 = arith.constant 0 : i32
    %c0_i32_1 = arith.constant 0 : i32
    return %c0_i32, %c0_i32_0 : i32, i32
  }
  func.func @transform_4(%arg0: i32) -> (i32, i32) {
    %c0_i32 = arith.constant 0 : i32
    %c0_i32_0 = arith.constant 0 : i32
    %c0_i32_1 = arith.constant 0 : i32
    return %c0_i32, %c0_i32_0 : i32, i32
  }
  func.func @transform_5(%arg0: i32) -> (i32, i32) {
    %c0_i32 = arith.constant 0 : i32
    %c0_i32_0 = arith.constant 0 : i32
    %c0_i32_1 = arith.constant 0 : i32
    return %c0_i32, %c0_i32_0 : i32, i32
  }
  func.func @transform_6(%arg0: i32) -> (i32, i32) {
    %c0_i32 = arith.constant 0 : i32
    %c0_i32_0 = arith.constant 0 : i32
    %c0_i32_1 = arith.constant 0 : i32
    return %c0_i32, %c0_i32_0 : i32, i32
  }
  func.func @transform_7(%arg0: i32) -> (i32, i32) {
    %c0_i32 = arith.constant 0 : i32
    %c0_i32_0 = arith.constant 0 : i32
    return %arg0, %c0_i32 : i32, i32
  }
}

</mosaic_0001>

<llo_original>
// kernel: tpu_custom_call.1
$region0: #{tpu_custom_call.1}
  #allocation0 [shape = 'u32[]', space=smem, size = 0x4, offset = 0x4, fixed_abs, tag = 'smem constant byte address 0x4 - core index']
  #allocation1 [shape = 'u32[144,128]{1,0:T(1,128)}', space=vmem, size = 0x12000, scoped, tag = 'internal scratch']
  %s0 = inlined_call_operand.hbm [shape: bf16[8,8], index: 0, kind: input, shape index: {}]
  %s1 = inlined_call_operand.hbm [shape: bf16[8,256], index: 1, kind: input, shape index: {}]
  %s2 = inlined_call_operand.vmem [shape: f32[1,256], index: 2, kind: input, shape index: {}]
  %s3 = inlined_call_operand.hbm [shape: bf16[256,256], index: 3, kind: input, shape index: {}]
  %s4 = inlined_call_operand.vmem [shape: f32[1,256], index: 4, kind: input, shape index: {}]
  %s5 = inlined_call_operand.hbm [shape: bf16[256,128], index: 5, kind: input, shape index: {}]
  %s6 = inlined_call_operand.vmem [shape: f32[1,128], index: 6, kind: input, shape index: {}]
  %s7 = inlined_call_operand.vmem [shape: f32[8,4], index: 7, kind: output, shape index: {}]
  %s8 = sld [smem:[#allocation0]]
  $region54: #{tpu_custom_call.1} parent=0
    _
  %s10 = ssub.s32 1, %s8
  %s11 = scalar_select 0, %s10, %s8
  $region1: #{tpu_custom_call.1} parent=0
    #allocation2 [shape = 'u8[2048]{0}', space=vmem, size = 0x800, scoped, tag = 'input window, operand 0, single buffered']
    #allocation3 [shape = 's32[1]{0}', space=sflag, size = 0x4, scoped, tag = 'scoped memory for tpu_custom_call.1']
    #allocation4 [shape = 'u8[4096]{0}', space=vmem, size = 0x1000, scoped, tag = 'input window, operand 1, single buffered']
    #allocation5 [shape = 's32[1]{0}', space=sflag, size = 0x4, scoped, tag = 'scoped memory for tpu_custom_call.1']
    #allocation6 [shape = 'u8[131072]{0}', space=vmem, size = 0x20000, scoped, tag = 'input window, operand 3, single buffered']
    #allocation7 [shape = 'u8[65536]{0}', space=vmem, size = 0x10000, scoped, tag = 'input window, operand 5, single buffered']
    #allocation8 [shape = 's32[1]{0}', space=sflag, size = 0x4, scoped, tag = 'scoped memory for tpu_custom_call.1']
    %12 = vsyncpa [#allocation3], 0
    %13 = vsyncpa [#allocation5], 0
    %14 = vsyncpa [#allocation8], 0
    // Predicated region
    $region2: #{tpu_custom_call.1} parent=1 // pred_check
      _
    $region3: #{tpu_custom_call.1} parent=1 // pred_check_branch
      %16 = sbr.rel (0) target = $region5
    $region4: #{tpu_custom_call.1} parent=1 // pred_region
      %s18 = ssub.s32 64, 64
      %19 = vsyncadd [#allocation3], %s18
      %s21 = sshll.u32 [#allocation2], 4
      %s22 = int_to_ptr.vmem [resolvable:$true] %s21
      %24 = dma.hbm_to_vmem [thread:$0]  %s0, 64, %s22, [#allocation3]
    $region5: #{tpu_custom_call.1} parent=1 // pred_fallthru
      _
    // Predicated region
    $region6: #{tpu_custom_call.1} parent=1 // pred_check
      _
    $region7: #{tpu_custom_call.1} parent=1 // pred_check_branch
      %26 = sbr.rel (0) target = $region9
    $region8: #{tpu_custom_call.1} parent=1 // pred_region
      %s28 = ssub.s32 128, 128
      %29 = vsyncadd [#allocation5], %s28
      %s31 = sshll.u32 [#allocation4], 4
      %s32 = int_to_ptr.vmem [resolvable:$true] %s31
      %34 = dma.hbm_to_vmem [thread:$0]  %s1, 128, %s32, [#allocation5]
    $region9: #{tpu_custom_call.1} parent=1 // pred_fallthru
      _
    // Predicated region
    $region10: #{tpu_custom_call.1} parent=1 // pred_check
      _
    $region11: #{tpu_custom_call.1} parent=1 // pred_check_branch
      %36 = sbr.rel (0) target = $region13
    $region12: #{tpu_custom_call.1} parent=1 // pred_region
      _
    $region13: #{tpu_custom_call.1} parent=1 // pred_fallthru
      _
    // Predicated region
    $region14: #{tpu_custom_call.1} parent=1 // pred_check
      _
    $region15: #{tpu_custom_call.1} parent=1 // pred_check_branch
      %38 = sbr.rel (0) target = $region17
    $region16: #{tpu_custom_call.1} parent=1 // pred_region
      %s40 = ssub.s32 4096, 4096
      %41 = vsyncadd [#allocation5], %s40
      %s42 = sshll.u32 [#allocation6], 4
      %s43 = int_to_ptr.vmem [resolvable:$true] %s42
      %48 = dma.hbm_to_vmem [thread:$0]  %s3, 4096, %s43, [#allocation5], 128, 128, 8
    $region17: #{tpu_custom_call.1} parent=1 // pred_fallthru
      _
    // Predicated region
    $region18: #{tpu_custom_call.1} parent=1 // pred_check
      _
    $region19: #{tpu_custom_call.1} parent=1 // pred_check_branch
      %50 = sbr.rel (0) target = $region21
    $region20: #{tpu_custom_call.1} parent=1 // pred_region
      _
    $region21: #{tpu_custom_call.1} parent=1 // pred_fallthru
      _
    // Predicated region
    $region22: #{tpu_custom_call.1} parent=1 // pred_check
      _
    $region23: #{tpu_custom_call.1} parent=1 // pred_check_branch
      %52 = sbr.rel (0) target = $region25
    $region24: #{tpu_custom_call.1} parent=1 // pred_region
      %s54 = ssub.s32 2048, 2048
      %55 = vsyncadd [#allocation8], %s54
      %s56 = sshll.u32 [#allocation7], 4
      %s57 = int_to_ptr.vmem [resolvable:$true] %s56
      %62 = dma.hbm_to_vmem [thread:$0]  %s5, 2048, %s57, [#allocation8], 64, 64, 4
    $region25: #{tpu_custom_call.1} parent=1 // pred_fallthru
      _
    // Predicated region
    $region26: #{tpu_custom_call.1} parent=1 // pred_check
      _
    $region27: #{tpu_custom_call.1} parent=1 // pred_check_branch
      %64 = sbr.rel (0) target = $region29
    $region28: #{tpu_custom_call.1} parent=1 // pred_region
      _
    $region29: #{tpu_custom_call.1} parent=1 // pred_fallthru
      _
    // Predicated region
    $region30: #{tpu_custom_call.1} parent=1 // pred_check
      _
    $region31: #{tpu_custom_call.1} parent=1 // pred_check_branch
      %66 = sbr.rel (0) target = $region33
    $region32: #{tpu_custom_call.1} parent=1 // pred_region
      %67 = dma.done [#allocation3], 64
    $region33: #{tpu_custom_call.1} parent=1 // pred_fallthru
      _
    // Predicated region
    $region34: #{tpu_custom_call.1} parent=1 // pred_check
      _
    $region35: #{tpu_custom_call.1} parent=1 // pred_check_branch
      %69 = sbr.rel (0) target = $region37
    $region36: #{tpu_custom_call.1} parent=1 // pred_region
      %70 = dma.done [#allocation5], 128
    $region37: #{tpu_custom_call.1} parent=1 // pred_fallthru
      _
    // Predicated region
    $region38: #{tpu_custom_call.1} parent=1 // pred_check
      _
    $region39: #{tpu_custom_call.1} parent=1 // pred_check_branch
      %72 = sbr.rel (0) target = $region41
    $region40: #{tpu_custom_call.1} parent=1 // pred_region
      %73 = dma.done [#allocation5], 4096
    $region41: #{tpu_custom_call.1} parent=1 // pred_fallthru
      _
    // Predicated region
    $region42: #{tpu_custom_call.1} parent=1 // pred_check
      _
    $region43: #{tpu_custom_call.1} parent=1 // pred_check_branch
      %75 = sbr.rel (0) target = $region45
    $region44: #{tpu_custom_call.1} parent=1 // pred_region
      %76 = dma.done [#allocation8], 2048
    $region45: #{tpu_custom_call.1} parent=1 // pred_fallthru
      _
    %v78 = vld [vmem:[#allocation2] sm:$0xf]
    %v79 = vld [vmem:[#allocation4] sm:$0xff]
    %v80 = vld [vmem:[%s2] sm:$0x3]
    %v82 = vlaneseq
    %v83 = vshrl.u32 %v82, 7
    %v84 = vsub.s32 0, %v83
    %v85 = vrot.slane %v80, %v84
    %v86 = vlaneseq
    %v87 = vshrl.u32 %v86, 7
    %v88 = vsub.s32 1, %v87
    %v89 = vrot.slane %v80, %v88
    %v93 = vunpack.c.l.b16 %v79
    %v94 = vunpack.c.h.b16 %v79
    %v95 = vpack.c.b16 %v93, %v93
    %v96 = vpack.c.b16 %v94, %v94
    %vm97 = vcmask 64512
    %v99 = vsel %vm97, %v78, 0
    %vm101 = vcmask 1043456
    %v103 = vsel %vm101, %v95, 0
    %v106 = vsel %vm101, %v96, 0
    %108 = vmatprep.subr.bf16.mxu0 %v106
    %109 = vmatpush1.bf16.msra.mxu0 %v103
    %110 = vmatprep.subr.bf16.mxu0 0
    %111 = vmatpush1.bf16.msra.mxu0 0
    %112 = vmatprep.subr.bf16.mxu0 0
    %113 = vmatpush1.bf16.msra.mxu0 0
    %114 = vmatprep.subr.bf16.mxu0 0
    %115 = vmatpush1.bf16.msra.mxu0 0
    %116 = vmatprep.subr.bf16.mxu0 0
    %117 = vmatpush1.bf16.msra.mxu0 0
    %118 = vmatprep.subr.bf16.mxu0 0
    %119 = vmatpush1.bf16.msra.mxu0 0
    %120 = vmatprep.subr.bf16.mxu0 0
    %121 = vmatpush1.bf16.msra.mxu0 0
    %122 = vmatprep.subr.bf16.mxu0 0
    %123 = vmatpush1.bf16.msra.mxu0 0
    %124 = vmatprep.subr.bf16.mxu0 0
    %125 = vmatpush1.bf16.msra.mxu0 0
    %126 = vmatprep.subr.bf16.mxu0 0
    %127 = vmatpush1.bf16.msra.mxu0 0
    %128 = vmatprep.subr.bf16.mxu0 0
    %129 = vmatpush1.bf16.msra.mxu0 0
    %130 = vmatprep.subr.bf16.mxu0 0
    %131 = vmatpush1.bf16.msra.mxu0 0
    %132 = vmatprep.subr.bf16.mxu0 0
    %133 = vmatpush1.bf16.msra.mxu0 0
    %134 = vmatprep.subr.bf16.mxu0 0
    %135 = vmatpush1.bf16.msra.mxu0 0
    %136 = vmatprep.subr.bf16.mxu0 0
    %137 = vmatpush1.bf16.msra.mxu0 0
    %138 = vmatprep.subr.bf16.mxu0 0
    %139 = vmatpush1.bf16.msra.mxu0 0
    %140 = vmatprep.mubr.bf16.mxu0 0
    %141 = vmatmul.mubr.bf16.gmra.mrb[0].mxu0 %v99
    %v142 = vpop.f32.mrb[0].mxu0
    %v143 = vadd.f32 %v85, %v142
    %v144 = vpop.f32.mrb[0].mxu0
    %v145 = vadd.f32 %v89, %v144
    %v146 = vpop.f32.mrb[0].mxu0
    %v147 = vpop.f32.mrb[0].mxu0
    %148 = vdwg.mxu0
    %v149 = vmax.f32 %v143, 0.0
    %v150 = vmax.f32 %v145, 0.0
    %v151 = vpack.c.bf16 %v149, %v149
    %v152 = vpack.c.bf16 %v150, %v150
    %v153 = vld [vmem:[#allocation6] sm:$0xff]
    %v154 = vld [vmem:[#allocation6 + $0x8] sm:$0xff]
    %v155 = vld [vmem:[#allocation6 + $0x10] sm:$0xff]
    %v156 = vld [vmem:[#allocation6 + $0x18] sm:$0xff]
    %v157 = vld [vmem:[#allocation6 + $0x20] sm:$0xff]
    %v158 = vld [vmem:[#allocation6 + $0x28] sm:$0xff]
    %v159 = vld [vmem:[#allocation6 + $0x30] sm:$0xff]
    %v160 = vld [vmem:[#allocation6 + $0x38] sm:$0xff]
    %v161 = vld [vmem:[#allocation6 + $0x40] sm:$0xff]
    %v162 = vld [vmem:[#allocation6 + $0x48] sm:$0xff]
    %v163 = vld [vmem:[#allocation6 + $0x50] sm:$0xff]
    %v164 = vld [vmem:[#allocation6 + $0x58] sm:$0xff]
    %v165 = vld [vmem:[#allocation6 + $0x60] sm:$0xff]
    %v166 = vld [vmem:[#allocation6 + $0x68] sm:$0xff]
    %v167 = vld [vmem:[#allocation6 + $0x70] sm:$0xff]
    %v168 = vld [vmem:[#allocation6 + $0x78] sm:$0xff]
    %v169 = vld [vmem:[#allocation6 + $0x80] sm:$0xff]
    %v170 = vld [vmem:[#allocation6 + $0x88] sm:$0xff]
    %v171 = vld [vmem:[#allocation6 + $0x90] sm:$0xff]
    %v172 = vld [vmem:[#allocation6 + $0x98] sm:$0xff]
    %v173 = vld [vmem:[#allocation6 + $0xa0] sm:$0xff]
    %v174 = vld [vmem:[#allocation6 + $0xa8] sm:$0xff]
    %v175 = vld [vmem:[#allocation6 + $0xb0] sm:$0xff]
    %v176 = vld [vmem:[#allocation6 + $0xb8] sm:$0xff]
    %v177 = vld [vmem:[#allocation6 + $0xc0] sm:$0xff]
    %v178 = vld [vmem:[#allocation6 + $0xc8] sm:$0xff]
    %v179 = vld [vmem:[#allocation6 + $0xd0] sm:$0xff]
    %v180 = vld [vmem:[#allocation6 + $0xd8] sm:$0xff]
    %v181 = vld [vmem:[#allocation6 + $0xe0] sm:$0xff]
    %v182 = vld [vmem:[#allocation6 + $0xe8] sm:$0xff]
    %v183 = vld [vmem:[#allocation6 + $0xf0] sm:$0xff]
    %v184 = vld [vmem:[#allocation6 + $0xf8] sm:$0xff]
    %v185 = vld [vmem:[%s4] sm:$0x3]
    %v187 = vlaneseq
    %v188 = vshrl.u32 %v187, 7
    %v189 = vsub.s32 0, %v188
    %v190 = vrot.slane %v185, %v189
    %v191 = vlaneseq
    %v192 = vshrl.u32 %v191, 7
    %v193 = vsub.s32 1, %v192
    %v194 = vrot.slane %v185, %v193
    %v229 = vunpack.c.l.b16 %v153
    %v230 = vunpack.c.h.b16 %v153
    %v231 = vunpack.c.l.b16 %v154
    %v232 = vunpack.c.h.b16 %v154
    %v233 = vunpack.c.l.b16 %v155
    %v234 = vunpack.c.h.b16 %v155
    %v235 = vunpack.c.l.b16 %v156
    %v236 = vunpack.c.h.b16 %v156
    %v237 = vunpack.c.l.b16 %v157
    %v238 = vunpack.c.h.b16 %v157
    %v239 = vunpack.c.l.b16 %v158
    %v240 = vunpack.c.h.b16 %v158
    %v241 = vunpack.c.l.b16 %v159
    %v242 = vunpack.c.h.b16 %v159
    %v243 = vunpack.c.l.b16 %v160
    %v244 = vunpack.c.h.b16 %v160
    %v245 = vunpack.c.l.b16 %v161
    %v246 = vunpack.c.h.b16 %v161
    %v247 = vunpack.c.l.b16 %v162
    %v248 = vunpack.c.h.b16 %v162
    %v249 = vunpack.c.l.b16 %v163
    %v250 = vunpack.c.h.b16 %v163
    %v251 = vunpack.c.l.b16 %v164
    %v252 = vunpack.c.h.b16 %v164
    %v253 = vunpack.c.l.b16 %v165
    %v254 = vunpack.c.h.b16 %v165
    %v255 = vunpack.c.l.b16 %v166
    %v256 = vunpack.c.h.b16 %v166
    %v257 = vunpack.c.l.b16 %v167
    %v258 = vunpack.c.h.b16 %v167
    %v259 = vunpack.c.l.b16 %v168
    %v260 = vunpack.c.h.b16 %v168
    %v261 = vunpack.c.l.b16 %v169
    %v262 = vunpack.c.h.b16 %v169
    %v263 = vunpack.c.l.b16 %v170
    %v264 = vunpack.c.h.b16 %v170
    %v265 = vunpack.c.l.b16 %v171
    %v266 = vunpack.c.h.b16 %v171
    %v267 = vunpack.c.l.b16 %v172
    %v268 = vunpack.c.h.b16 %v172
    %v269 = vunpack.c.l.b16 %v173
    %v270 = vunpack.c.h.b16 %v173
    %v271 = vunpack.c.l.b16 %v174
    %v272 = vunpack.c.h.b16 %v174
    %v273 = vunpack.c.l.b16 %v175
    %v274 = vunpack.c.h.b16 %v175
    %v275 = vunpack.c.l.b16 %v176
    %v276 = vunpack.c.h.b16 %v176
    %v277 = vunpack.c.l.b16 %v177
    %v278 = vunpack.c.h.b16 %v177
    %v279 = vunpack.c.l.b16 %v178
    %v280 = vunpack.c.h.b16 %v178
    %v281 = vunpack.c.l.b16 %v179
    %v282 = vunpack.c.h.b16 %v179
    %v283 = vunpack.c.l.b16 %v180
    %v284 = vunpack.c.h.b16 %v180
    %v285 = vunpack.c.l.b16 %v181
    %v286 = vunpack.c.h.b16 %v181
    %v287 = vunpack.c.l.b16 %v182
    %v288 = vunpack.c.h.b16 %v182
    %v289 = vunpack.c.l.b16 %v183
    %v290 = vunpack.c.h.b16 %v183
    %v291 = vunpack.c.l.b16 %v184
    %v292 = vunpack.c.h.b16 %v184
    %v293 = vpack.c.b16 %v231, %v229
    %v294 = vpack.c.b16 %v232, %v230
    %v295 = vpack.c.b16 %v235, %v233
    %v296 = vpack.c.b16 %v236, %v234
    %v297 = vpack.c.b16 %v239, %v237
    %v298 = vpack.c.b16 %v240, %v238
    %v299 = vpack.c.b16 %v243, %v241
    %v300 = vpack.c.b16 %v244, %v242
    %v301 = vpack.c.b16 %v247, %v245
    %v302 = vpack.c.b16 %v248, %v246
    %v303 = vpack.c.b16 %v251, %v249
    %v304 = vpack.c.b16 %v252, %v250
    %v305 = vpack.c.b16 %v255, %v253
    %v306 = vpack.c.b16 %v256, %v254
    %v307 = vpack.c.b16 %v259, %v257
    %v308 = vpack.c.b16 %v260, %v258
    %v309 = vpack.c.b16 %v263, %v261
    %v310 = vpack.c.b16 %v264, %v262
    %v311 = vpack.c.b16 %v267, %v265
    %v312 = vpack.c.b16 %v268, %v266
    %v313 = vpack.c.b16 %v271, %v269
    %v314 = vpack.c.b16 %v272, %v270
    %v315 = vpack.c.b16 %v275, %v273
    %v316 = vpack.c.b16 %v276, %v274
    %v317 = vpack.c.b16 %v279, %v277
    %v318 = vpack.c.b16 %v280, %v278
    %v319 = vpack.c.b16 %v283, %v281
    %v320 = vpack.c.b16 %v284, %v282
    %v321 = vpack.c.b16 %v287, %v285
    %v322 = vpack.c.b16 %v288, %v286
    %v323 = vpack.c.b16 %v291, %v289
    %v324 = vpack.c.b16 %v292, %v290
    %357 = vmatprep.subr.bf16.mxu0 %v294
    %358 = vmatpush1.bf16.msra.mxu0 %v293
    %359 = vmatprep.subr.bf16.mxu0 %v296
    %360 = vmatpush1.bf16.msra.mxu0 %v295
    %361 = vmatprep.subr.bf16.mxu0 %v298
    %362 = vmatpush1.bf16.msra.mxu0 %v297
    %363 = vmatprep.subr.bf16.mxu0 %v300
    %364 = vmatpush1.bf16.msra.mxu0 %v299
    %365 = vmatprep.subr.bf16.mxu0 %v302
    %366 = vmatpush1.bf16.msra.mxu0 %v301
    %367 = vmatprep.subr.bf16.mxu0 %v304
    %368 = vmatpush1.bf16.msra.mxu0 %v303
    %369 = vmatprep.subr.bf16.mxu0 %v306
    %370 = vmatpush1.bf16.msra.mxu0 %v305
    %371 = vmatprep.subr.bf16.mxu0 %v308
    %372 = vmatpush1.bf16.msra.mxu0 %v307
    %373 = vmatprep.subr.bf16.mxu0 %v310
    %374 = vmatpush1.bf16.msra.mxu0 %v309
    %375 = vmatprep.subr.bf16.mxu0 %v312
    %376 = vmatpush1.bf16.msra.mxu0 %v311
    %377 = vmatprep.subr.bf16.mxu0 %v314
    %378 = vmatpush1.bf16.msra.mxu0 %v313
    %379 = vmatprep.subr.bf16.mxu0 %v316
    %380 = vmatpush1.bf16.msra.mxu0 %v315
    %381 = vmatprep.subr.bf16.mxu0 %v318
    %382 = vmatpush1.bf16.msra.mxu0 %v317
    %383 = vmatprep.subr.bf16.mxu0 %v320
    %384 = vmatpush1.bf16.msra.mxu0 %v319
    %385 = vmatprep.subr.bf16.mxu0 %v322
    %386 = vmatpush1.bf16.msra.mxu0 %v321
    %387 = vmatprep.subr.bf16.mxu0 %v324
    %388 = vmatpush1.bf16.msra.mxu0 %v323
    %389 = vmatprep.mubr.bf16.mxu0 %v152
    %390 = vmatmul.mubr.bf16.gmra.mrb[0].mxu0 %v151
    %v391 = vpop.f32.mrb[0].mxu0
    %v392 = vadd.f32 %v190, %v391
    %v393 = vpop.f32.mrb[0].mxu0
    %v394 = vadd.f32 %v194, %v393
    %v395 = vpop.f32.mrb[0].mxu0
    %v396 = vpop.f32.mrb[0].mxu0
    %397 = vdwg.mxu0
    %v398 = vmax.f32 %v392, 0.0
    %v399 = vmax.f32 %v394, 0.0
    %v400 = vpack.c.bf16 %v398, %v398
    %v401 = vpack.c.bf16 %v399, %v399
    %v402 = vld [vmem:[#allocation7] sm:$0xf]
    %v403 = vld [vmem:[#allocation7 + $0x4] sm:$0xf]
    %v404 = vld [vmem:[#allocation7 + $0x8] sm:$0xf]
    %v405 = vld [vmem:[#allocation7 + $0xc] sm:$0xf]
    %v406 = vld [vmem:[#allocation7 + $0x10] sm:$0xf]
    %v407 = vld [vmem:[#allocation7 + $0x14] sm:$0xf]
    %v408 = vld [vmem:[#allocation7 + $0x18] sm:$0xf]
    %v409 = vld [vmem:[#allocation7 + $0x1c] sm:$0xf]
    %v410 = vld [vmem:[#allocation7 + $0x20] sm:$0xf]
    %v411 = vld [vmem:[#allocation7 + $0x24] sm:$0xf]
    %v412 = vld [vmem:[#allocation7 + $0x28] sm:$0xf]
    %v413 = vld [vmem:[#allocation7 + $0x2c] sm:$0xf]
    %v414 = vld [vmem:[#allocation7 + $0x30] sm:$0xf]
    %v415 = vld [vmem:[#allocation7 + $0x34] sm:$0xf]
    %v416 = vld [vmem:[#allocation7 + $0x38] sm:$0xf]
    %v417 = vld [vmem:[#allocation7 + $0x3c] sm:$0xf]
    %v418 = vld [vmem:[#allocation7 + $0x40] sm:$0xf]
    %v419 = vld [vmem:[#allocation7 + $0x44] sm:$0xf]
    %v420 = vld [vmem:[#allocation7 + $0x48] sm:$0xf]
    %v421 = vld [vmem:[#allocation7 + $0x4c] sm:$0xf]
    %v422 = vld [vmem:[#allocation7 + $0x50] sm:$0xf]
    %v423 = vld [vmem:[#allocation7 + $0x54] sm:$0xf]
    %v424 = vld [vmem:[#allocation7 + $0x58] sm:$0xf]
    %v425 = vld [vmem:[#allocation7 + $0x5c] sm:$0xf]
    %v426 = vld [vmem:[#allocation7 + $0x60] sm:$0xf]
    %v427 = vld [vmem:[#allocation7 + $0x64] sm:$0xf]
    %v428 = vld [vmem:[#allocation7 + $0x68] sm:$0xf]
    %v429 = vld [vmem:[#allocation7 + $0x6c] sm:$0xf]
    %v430 = vld [vmem:[#allocation7 + $0x70] sm:$0xf]
    %v431 = vld [vmem:[#allocation7 + $0x74] sm:$0xf]
    %v432 = vld [vmem:[#allocation7 + $0x78] sm:$0xf]
    %v433 = vld [vmem:[#allocation7 + $0x7c] sm:$0xf]
    %v434 = vld [vmem:[%s6] sm:$0x1]
    %v436 = vlaneseq
    %v437 = vshrl.u32 %v436, 7
    %v438 = vsub.s32 0, %v437
    %v439 = vrot.slane %v434, %v438
    %v473 = vunpack.c.l.b16 %v402
    %v474 = vunpack.c.l.b16 %v403
    %v475 = vunpack.c.l.b16 %v404
    %v476 = vunpack.c.l.b16 %v405
    %v477 = vunpack.c.l.b16 %v406
    %v478 = vunpack.c.l.b16 %v407
    %v479 = vunpack.c.l.b16 %v408
    %v480 = vunpack.c.l.b16 %v409
    %v481 = vunpack.c.l.b16 %v410
    %v482 = vunpack.c.l.b16 %v411
    %v483 = vunpack.c.l.b16 %v412
    %v484 = vunpack.c.l.b16 %v413
    %v485 = vunpack.c.l.b16 %v414
    %v486 = vunpack.c.l.b16 %v415
    %v487 = vunpack.c.l.b16 %v416
    %v488 = vunpack.c.l.b16 %v417
    %v489 = vunpack.c.l.b16 %v418
    %v490 = vunpack.c.l.b16 %v419
    %v491 = vunpack.c.l.b16 %v420
    %v492 = vunpack.c.l.b16 %v421
    %v493 = vunpack.c.l.b16 %v422
    %v494 = vunpack.c.l.b16 %v423
    %v495 = vunpack.c.l.b16 %v424
    %v496 = vunpack.c.l.b16 %v425
    %v497 = vunpack.c.l.b16 %v426
    %v498 = vunpack.c.l.b16 %v427
    %v499 = vunpack.c.l.b16 %v428
    %v500 = vunpack.c.l.b16 %v429
    %v501 = vunpack.c.l.b16 %v430
    %v502 = vunpack.c.l.b16 %v431
    %v503 = vunpack.c.l.b16 %v432
    %v504 = vunpack.c.l.b16 %v433
    %v505 = vpack.c.b16 %v474, %v473
    %v506 = vpack.c.b16 %v476, %v475
    %v507 = vpack.c.b16 %v478, %v477
    %v508 = vpack.c.b16 %v480, %v479
    %v509 = vpack.c.b16 %v482, %v481
    %v510 = vpack.c.b16 %v484, %v483
    %v511 = vpack.c.b16 %v486, %v485
    %v512 = vpack.c.b16 %v488, %v487
    %v513 = vpack.c.b16 %v490, %v489
    %v514 = vpack.c.b16 %v492, %v491
    %v515 = vpack.c.b16 %v494, %v493
    %v516 = vpack.c.b16 %v496, %v495
    %v517 = vpack.c.b16 %v498, %v497
    %v518 = vpack.c.b16 %v500, %v499
    %v519 = vpack.c.b16 %v502, %v501
    %v520 = vpack.c.b16 %v504, %v503
    %537 = vmatprep.subr.bf16.mxu0 0
    %538 = vmatpush1.bf16.msra.mxu0 %v505
    %539 = vmatprep.subr.bf16.mxu0 0
    %540 = vmatpush1.bf16.msra.mxu0 %v506
    %541 = vmatprep.subr.bf16.mxu0 0
    %542 = vmatpush1.bf16.msra.mxu0 %v507
    %543 = vmatprep.subr.bf16.mxu0 0
    %544 = vmatpush1.bf16.msra.mxu0 %v508
    %545 = vmatprep.subr.bf16.mxu0 0
    %546 = vmatpush1.bf16.msra.mxu0 %v509
    %547 = vmatprep.subr.bf16.mxu0 0
    %548 = vmatpush1.bf16.msra.mxu0 %v510
    %549 = vmatprep.subr.bf16.mxu0 0
    %550 = vmatpush1.bf16.msra.mxu0 %v511
    %551 = vmatprep.subr.bf16.mxu0 0
    %552 = vmatpush1.bf16.msra.mxu0 %v512
    %553 = vmatprep.subr.bf16.mxu0 0
    %554 = vmatpush1.bf16.msra.mxu0 %v513
    %555 = vmatprep.subr.bf16.mxu0 0
    %556 = vmatpush1.bf16.msra.mxu0 %v514
    %557 = vmatprep.subr.bf16.mxu0 0
    %558 = vmatpush1.bf16.msra.mxu0 %v515
    %559 = vmatprep.subr.bf16.mxu0 0
    %560 = vmatpush1.bf16.msra.mxu0 %v516
    %561 = vmatprep.subr.bf16.mxu0 0
    %562 = vmatpush1.bf16.msra.mxu0 %v517
    %563 = vmatprep.subr.bf16.mxu0 0
    %564 = vmatpush1.bf16.msra.mxu0 %v518
    %565 = vmatprep.subr.bf16.mxu0 0
    %566 = vmatpush1.bf16.msra.mxu0 %v519
    %567 = vmatprep.subr.bf16.mxu0 0
    %568 = vmatpush1.bf16.msra.mxu0 %v520
    %569 = vmatprep.mubr.bf16.mxu0 %v401
    %570 = vmatmul.mubr.bf16.gmra.mrb[0].mxu0 %v400
    %v571 = vpop.f32.mrb[0].mxu0
    %v572 = vadd.f32 %v439, %v571
    %v573 = vpop.f32.mrb[0].mxu0
    %v574 = vpop.f32.mrb[0].mxu0
    %v575 = vpop.f32.mrb[0].mxu0
    %576 = vdwg.mxu0
    %vm577 = vcmask 31744
    %578 = vst.msk [vmem:[%s7] sm:$0xff] %vm577, %v572
    // Predicated region
    $region46: #{tpu_custom_call.1} parent=1 // pred_check
      _
    $region47: #{tpu_custom_call.1} parent=1 // pred_check_branch
      %580 = sbr.rel (0) target = $region49
    $region48: #{tpu_custom_call.1} parent=1 // pred_region
      _
    $region49: #{tpu_custom_call.1} parent=1 // pred_fallthru
      _
    // Predicated region
    $region50: #{tpu_custom_call.1} parent=1 // pred_check
      _
    $region51: #{tpu_custom_call.1} parent=1 // pred_check_branch
      %582 = sbr.rel (0) target = $region53
    $region52: #{tpu_custom_call.1} parent=1 // pred_region
      _
    $region53: #{tpu_custom_call.1} parent=1 // pred_fallthru
      _
    %583 = vsyncpa [#allocation3], 1
    %584 = vsyncpa [#allocation5], 1
    %585 = vsyncpa [#allocation8], 1

</llo_original>
